<compile_context>
chip_gen: v7x
topology: tpu7x:2x2x1
jax: 0.10.0
libtpu: 0.0.40
codegen_flags: <defaults>
</compile_context>

<pallas_src>
import functools

import jax
import jax.numpy as jnp
from jax.experimental import pallas as pl
from jax.experimental.pallas import tpu as pltpu


def _bayesian_loss_kernel(x_ref, tgt_ref, wt_ref, b_ref, ecut_ref,
                          out_ref, acc_ref, *, n_classes):
    # x_ref:    (rows, 128) f32   scores for this tile of samples
    # tgt_ref:  (rows, 128) i32   targets (sentinel M for padded samples)
    # wt_ref:   ((M-1)*M,)  f32   SMEM: Wt[j,t] = Pi[t]*(C[j,t]-C[j+1,t]), flat j*M+t
    # b_ref:    (M,)        f32   SMEM: b[t]    = Pi[t]*C[M-1,t]
    # ecut_ref: (M-1,)      f32   SMEM: exp(-cutpoints[j])
    # out_ref:  (1, 1)      f32   final scalar (written on last grid step only)
    # acc_ref:  (rows, 128) f32   per-lane partial sums, resident across the grid
    M = n_classes

    @pl.when(pl.program_id(0) == 0)
    def _():
        acc_ref[...] = jnp.zeros_like(acc_ref)

    x = x_ref[...]                     # (rows, 128)
    tgt = tgt_ref[...]                 # (rows, 128)

    # sigmoid(cut_j - x) = 1 / (1 + exp(x) * exp(-cut_j))
    e = jnp.exp(x)                     # single EUP exp per sample
    sig = [pl.reciprocal(1.0 + e * ecut_ref[j], approx=True)
           for j in range(M - 1)]      # (M-1) approx reciprocals (EUP slot)

    # Unrolled class selection (replaces the one-hot weighting).
    loss = jnp.zeros_like(x)
    for t in range(M):
        ct = b_ref[t]                                  # scalar from SMEM
        for j in range(M - 1):
            ct = ct + wt_ref[j * M + t] * sig[j]       # scalar * vreg FMA
        loss = loss + jnp.where(tgt == t, ct, 0.0)     # sentinel M matches nothing

    acc_ref[...] += loss

    @pl.when(pl.program_id(0) == pl.num_programs(0) - 1)
    def _():
        out_ref[...] = jnp.zeros_like(out_ref) + jnp.sum(acc_ref[...])


def bayesian_loss(inputs, targets, Pi, C, cutpoints, n_classes, tile_n=8192):
    M = int(n_classes)
    N = inputs.shape[0]
    LANE, SUB = 128, 8
    min_tile = LANE * SUB                                  # 1024 samples

    # Keep tiles (8,128)-aligned; shrink for tiny inputs to avoid huge padding.
    tile_n = int(max(min_tile, min(int(tile_n),
                                   pl.cdiv(N, min_tile) * min_tile)))
    n_tiles = pl.cdiv(N, tile_n)
    n_pad = n_tiles * tile_n
    rows = tile_n // LANE                                  # multiple of 8

    # Pad tail; sentinel class M => padded samples select no class -> contribute 0.
    x = jnp.pad(inputs.astype(jnp.float32), (0, n_pad - N))
    t = jnp.pad(targets.astype(jnp.int32), (0, n_pad - N), constant_values=M)
    x2 = x.reshape(n_pad // LANE, LANE)
    t2 = t.reshape(n_pad // LANE, LANE)

    # Tiny per-class tables (go to SMEM).
    Cf = C.astype(jnp.float32)
    Pif = Pi.astype(jnp.float32)
    cut = cutpoints.astype(jnp.float32)
    wt = (Pif[None, :] * (Cf[:-1, :] - Cf[1:, :])).reshape(-1)   # ((M-1)*M,)
    b = Pif * Cf[-1, :]                                          # (M,)
    ecut = jnp.exp(-cut)                                         # (M-1,)

    kernel = functools.partial(_bayesian_loss_kernel, n_classes=M)

    out = pl.pallas_call(
        kernel,
        out_shape=jax.ShapeDtypeStruct((1, 1), jnp.float32),
        grid_spec=pltpu.PrefetchScalarGridSpec(
            num_scalar_prefetch=0,
            grid=(n_tiles,),
            in_specs=[
                pl.BlockSpec((rows, LANE), lambda i: (i, 0)),          # x
                pl.BlockSpec((rows, LANE), lambda i: (i, 0)),          # targets
                pl.BlockSpec(memory_space=pltpu.MemorySpace.SMEM),     # Wt (flat)
                pl.BlockSpec(memory_space=pltpu.MemorySpace.SMEM),     # b
                pl.BlockSpec(memory_space=pltpu.MemorySpace.SMEM),     # exp(-cut)
            ],
            out_specs=pl.BlockSpec((1, 1), lambda i: (0, 0)),
            scratch_shapes=[pltpu.VMEM((rows, LANE), jnp.float32)],
        ),
        compiler_params=pltpu.CompilerParams(
            dimension_semantics=("arbitrary",)),
    )(x2, t2, wt, b, ecut)
    return out[0, 0]


def bayesian_loss_ref(inputs, targets, Pi, C, cutpoints, n_classes):
    # Pure-JAX mirror of the PyTorch forward (K = sigmoid), for verification.
    total = jnp.float32(0.0)
    for t in range(n_classes):
        x_t = inputs[targets == t]
        C_t = C[:, t]
        cost_diff = C_t[:-1] - C_t[1:]
        cd = cutpoints[None, :] - x_t[:, None]
        cl = jnp.sum(cost_diff * jax.nn.sigmoid(cd), axis=1) + C_t[-1]
        total = total + jnp.sum(cl) * Pi[t]
    return total


if __name__ == "__main__":
    M = 4  # n_classes

    # Deterministic module "parameters":
    Pi = jnp.full((M,), 1.0 / M, dtype=jnp.float32)            # class priors
    idx = jnp.arange(M, dtype=jnp.float32)
    C = jnp.abs(idx[:, None] - idx[None, :])                   # |p - t| cost matrix
    cutpoints = jnp.arange(M - 1, dtype=jnp.float32)           # nn.Parameter init

    key = jax.random.PRNGKey(0)

    # Case 1: small, single grid step.
    k1, k2, k3, k4 = jax.random.split(key, 4)
    N1 = 128
    x1 = jax.random.normal(k1, (N1,), jnp.float32)
    t1 = jax.random.randint(k2, (N1,), 0, M)
    out1 = jax.block_until_ready(bayesian_loss(x1, t1, Pi, C, cutpoints, M))
    ref1 = bayesian_loss_ref(x1, t1, Pi, C, cutpoints, M)
    assert abs(float(out1) - float(ref1)) <= 5e-3 * max(1.0, abs(float(ref1))), (
        float(out1), float(ref1))

    # Case 2: ragged N with multiple grid steps (exercises accumulator + tail mask).
    N2 = 2500
    x2 = jax.random.normal(k3, (N2,), jnp.float32)
    t2 = jax.random.randint(k4, (N2,), 0, M)
    out2 = jax.block_until_ready(
        bayesian_loss(x2, t2, Pi, C, cutpoints, M, tile_n=1024))
    ref2 = bayesian_loss_ref(x2, t2, Pi, C, cutpoints, M)
    assert abs(float(out2) - float(ref2)) <= 5e-3 * max(1.0, abs(float(ref2))), (
        float(out2), float(ref2))

    print("KERNEL_OK")
</pallas_src>

<mosaic_0001>
module attributes {stable_mosaic.version = 11 : i64} {
  func.func @_bayesian_loss_kernel(%arg0: i32, %arg1: memref<8x128xf32, #tpu.memory_space<vmem>>, %arg2: memref<8x128xi32, #tpu.memory_space<vmem>>, %arg3: memref<12xf32, #tpu.memory_space<smem>>, %arg4: memref<4xf32, #tpu.memory_space<smem>>, %arg5: memref<3xf32, #tpu.memory_space<smem>>, %arg6: memref<1x1xf32, #tpu.memory_space<vmem>>, %arg7: memref<8x128xf32, #tpu.memory_space<vmem>>) attributes {dimension_semantics = [#tpu.dimension_semantics<arbitrary>], iteration_bounds = array<i64: 1>, scalar_prefetch = 0 : i64, scratch_operands = 1 : i64, tpu.core_type = #tpu.core_type<tc>, window_params = [{transform_indices = @transform_0, window_bounds = array<i64: 8, 128>}, {transform_indices = @transform_1, window_bounds = array<i64: 8, 128>}, {transform_indices = @transform_2, window_bounds = array<i64: 12>}, {transform_indices = @transform_3, window_bounds = array<i64: 4>}, {transform_indices = @transform_4, window_bounds = array<i64: 3>}, {pipeline_mode = #tpu.pipeline_mode<synchronous>, transform_indices = @transform_5, window_bounds = array<i64: 1, 1>}]} {
    %c0_i32 = arith.constant 0 : i32
    %0 = arith.cmpi eq, %arg0, %c0_i32 : i32
    %1 = arith.extui %0 : i1 to i32
    %c0_i32_0 = arith.constant 0 : i32
    %2 = arith.cmpi ne, %1, %c0_i32_0 : i32
    scf.if %2 {
      %cst_26 = arith.constant 0.000000e+00 : f32
      %107 = vector.broadcast %cst_26 : f32 to vector<8x128xf32>
      %c0_27 = arith.constant 0 : index
      %c0_28 = arith.constant 0 : index
      %108 = vector.load %arg7[%c0_27, %c0_28] : memref<8x128xf32, #tpu.memory_space<vmem>>, vector<8x128xf32>
      tpu.vector_store %arg7[%c0_27, %c0_28], %107 {strides = array<i32>} : memref<8x128xf32, #tpu.memory_space<vmem>>, vector<8x128xf32>,
    } else {
    }
    %c0 = arith.constant 0 : index
    %c0_1 = arith.constant 0 : index
    %3 = vector.load %arg1[%c0, %c0_1] : memref<8x128xf32, #tpu.memory_space<vmem>>, vector<8x128xf32>
    %c0_2 = arith.constant 0 : index
    %c0_3 = arith.constant 0 : index
    %4 = vector.load %arg2[%c0_2, %c0_3] : memref<8x128xi32, #tpu.memory_space<vmem>>, vector<8x128xi32>
    %5 = math.exp %3 : vector<8x128xf32>
    %c0_4 = arith.constant 0 : index
    %6 = memref.load %arg5[%c0_4] : memref<3xf32, #tpu.memory_space<smem>>
    %7 = vector.broadcast %6 : f32 to vector<8x128xf32>
    %8 = arith.mulf %5, %7 : vector<8x128xf32>
    %cst = arith.constant 1.000000e+00 : f32
    %9 = vector.broadcast %cst : f32 to vector<8x128xf32>
    %10 = arith.addf %9, %8 : vector<8x128xf32>
    %11 = tpu.reciprocal %10 {approx = true} : vector<8x128xf32> -> vector<8x128xf32>
    %c1 = arith.constant 1 : index
    %12 = memref.load %arg5[%c1] : memref<3xf32, #tpu.memory_space<smem>>
    %13 = vector.broadcast %12 : f32 to vector<8x128xf32>
    %14 = arith.mulf %5, %13 : vector<8x128xf32>
    %cst_5 = arith.constant 1.000000e+00 : f32
    %15 = vector.broadcast %cst_5 : f32 to vector<8x128xf32>
    %16 = arith.addf %15, %14 : vector<8x128xf32>
    %17 = tpu.reciprocal %16 {approx = true} : vector<8x128xf32> -> vector<8x128xf32>
    %c2 = arith.constant 2 : index
    %18 = memref.load %arg5[%c2] : memref<3xf32, #tpu.memory_space<smem>>
    %19 = vector.broadcast %18 : f32 to vector<8x128xf32>
    %20 = arith.mulf %5, %19 : vector<8x128xf32>
    %cst_6 = arith.constant 1.000000e+00 : f32
    %21 = vector.broadcast %cst_6 : f32 to vector<8x128xf32>
    %22 = arith.addf %21, %20 : vector<8x128xf32>
    %23 = tpu.reciprocal %22 {approx = true} : vector<8x128xf32> -> vector<8x128xf32>
    %cst_7 = arith.constant 0.000000e+00 : f32
    %24 = vector.broadcast %cst_7 : f32 to vector<8x128xf32>
    %c0_8 = arith.constant 0 : index
    %25 = memref.load %arg4[%c0_8] : memref<4xf32, #tpu.memory_space<smem>>
    %c0_9 = arith.constant 0 : index
    %26 = memref.load %arg3[%c0_9] : memref<12xf32, #tpu.memory_space<smem>>
    %27 = vector.broadcast %26 : f32 to vector<8x128xf32>
    %28 = arith.mulf %27, %11 : vector<8x128xf32>
    %29 = vector.broadcast %25 : f32 to vector<8x128xf32>
    %30 = arith.addf %29, %28 : vector<8x128xf32>
    %c4 = arith.constant 4 : index
    %31 = memref.load %arg3[%c4] : memref<12xf32, #tpu.memory_space<smem>>
    %32 = vector.broadcast %31 : f32 to vector<8x128xf32>
    %33 = arith.mulf %32, %17 : vector<8x128xf32>
    %34 = arith.addf %30, %33 : vector<8x128xf32>
    %c8 = arith.constant 8 : index
    %35 = memref.load %arg3[%c8] : memref<12xf32, #tpu.memory_space<smem>>
    %36 = vector.broadcast %35 : f32 to vector<8x128xf32>
    %37 = arith.mulf %36, %23 : vector<8x128xf32>
    %38 = arith.addf %34, %37 : vector<8x128xf32>
    %c0_i32_10 = arith.constant 0 : i32
    %39 = vector.broadcast %c0_i32_10 : i32 to vector<8x128xi32>
    %40 = arith.cmpi eq, %4, %39 : vector<8x128xi32>
    %cst_11 = arith.constant 0.000000e+00 : f32
    %41 = vector.broadcast %cst_11 : f32 to vector<8x128xf32>
    %42 = arith.select %40, %38, %41 : vector<8x128xi1>, vector<8x128xf32>
    %43 = arith.addf %24, %42 : vector<8x128xf32>
    %c1_12 = arith.constant 1 : index
    %44 = memref.load %arg4[%c1_12] : memref<4xf32, #tpu.memory_space<smem>>
    %c1_13 = arith.constant 1 : index
    %45 = memref.load %arg3[%c1_13] : memref<12xf32, #tpu.memory_space<smem>>
    %46 = vector.broadcast %45 : f32 to vector<8x128xf32>
    %47 = arith.mulf %46, %11 : vector<8x128xf32>
    %48 = vector.broadcast %44 : f32 to vector<8x128xf32>
    %49 = arith.addf %48, %47 : vector<8x128xf32>
    %c5 = arith.constant 5 : index
    %50 = memref.load %arg3[%c5] : memref<12xf32, #tpu.memory_space<smem>>
    %51 = vector.broadcast %50 : f32 to vector<8x128xf32>
    %52 = arith.mulf %51, %17 : vector<8x128xf32>
    %53 = arith.addf %49, %52 : vector<8x128xf32>
    %c9 = arith.constant 9 : index
    %54 = memref.load %arg3[%c9] : memref<12xf32, #tpu.memory_space<smem>>
    %55 = vector.broadcast %54 : f32 to vector<8x128xf32>
    %56 = arith.mulf %55, %23 : vector<8x128xf32>
    %57 = arith.addf %53, %56 : vector<8x128xf32>
    %c1_i32 = arith.constant 1 : i32
    %58 = vector.broadcast %c1_i32 : i32 to vector<8x128xi32>
    %59 = arith.cmpi eq, %4, %58 : vector<8x128xi32>
    %cst_14 = arith.constant 0.000000e+00 : f32
    %60 = vector.broadcast %cst_14 : f32 to vector<8x128xf32>
    %61 = arith.select %59, %57, %60 : vector<8x128xi1>, vector<8x128xf32>
    %62 = arith.addf %43, %61 : vector<8x128xf32>
    %c2_15 = arith.constant 2 : index
    %63 = memref.load %arg4[%c2_15] : memref<4xf32, #tpu.memory_space<smem>>
    %c2_16 = arith.constant 2 : index
    %64 = memref.load %arg3[%c2_16] : memref<12xf32, #tpu.memory_space<smem>>
    %65 = vector.broadcast %64 : f32 to vector<8x128xf32>
    %66 = arith.mulf %65, %11 : vector<8x128xf32>
    %67 = vector.broadcast %63 : f32 to vector<8x128xf32>
    %68 = arith.addf %67, %66 : vector<8x128xf32>
    %c6 = arith.constant 6 : index
    %69 = memref.load %arg3[%c6] : memref<12xf32, #tpu.memory_space<smem>>
    %70 = vector.broadcast %69 : f32 to vector<8x128xf32>
    %71 = arith.mulf %70, %17 : vector<8x128xf32>
    %72 = arith.addf %68, %71 : vector<8x128xf32>
    %c10 = arith.constant 10 : index
    %73 = memref.load %arg3[%c10] : memref<12xf32, #tpu.memory_space<smem>>
    %74 = vector.broadcast %73 : f32 to vector<8x128xf32>
    %75 = arith.mulf %74, %23 : vector<8x128xf32>
    %76 = arith.addf %72, %75 : vector<8x128xf32>
    %c2_i32 = arith.constant 2 : i32
    %77 = vector.broadcast %c2_i32 : i32 to vector<8x128xi32>
    %78 = arith.cmpi eq, %4, %77 : vector<8x128xi32>
    %cst_17 = arith.constant 0.000000e+00 : f32
    %79 = vector.broadcast %cst_17 : f32 to vector<8x128xf32>
    %80 = arith.select %78, %76, %79 : vector<8x128xi1>, vector<8x128xf32>
    %81 = arith.addf %62, %80 : vector<8x128xf32>
    %c3 = arith.constant 3 : index
    %82 = memref.load %arg4[%c3] : memref<4xf32, #tpu.memory_space<smem>>
    %c3_18 = arith.constant 3 : index
    %83 = memref.load %arg3[%c3_18] : memref<12xf32, #tpu.memory_space<smem>>
    %84 = vector.broadcast %83 : f32 to vector<8x128xf32>
    %85 = arith.mulf %84, %11 : vector<8x128xf32>
    %86 = vector.broadcast %82 : f32 to vector<8x128xf32>
    %87 = arith.addf %86, %85 : vector<8x128xf32>
    %c7 = arith.constant 7 : index
    %88 = memref.load %arg3[%c7] : memref<12xf32, #tpu.memory_space<smem>>
    %89 = vector.broadcast %88 : f32 to vector<8x128xf32>
    %90 = arith.mulf %89, %17 : vector<8x128xf32>
    %91 = arith.addf %87, %90 : vector<8x128xf32>
    %c11 = arith.constant 11 : index
    %92 = memref.load %arg3[%c11] : memref<12xf32, #tpu.memory_space<smem>>
    %93 = vector.broadcast %92 : f32 to vector<8x128xf32>
    %94 = arith.mulf %93, %23 : vector<8x128xf32>
    %95 = arith.addf %91, %94 : vector<8x128xf32>
    %c3_i32 = arith.constant 3 : i32
    %96 = vector.broadcast %c3_i32 : i32 to vector<8x128xi32>
    %97 = arith.cmpi eq, %4, %96 : vector<8x128xi32>
    %cst_19 = arith.constant 0.000000e+00 : f32
    %98 = vector.broadcast %cst_19 : f32 to vector<8x128xf32>
    %99 = arith.select %97, %95, %98 : vector<8x128xi1>, vector<8x128xf32>
    %100 = arith.addf %81, %99 : vector<8x128xf32>
    %c0_20 = arith.constant 0 : index
    %c0_21 = arith.constant 0 : index
    %101 = vector.load %arg7[%c0_20, %c0_21] : memref<8x128xf32, #tpu.memory_space<vmem>>, vector<8x128xf32>
    %102 = arith.addf %101, %100 : vector<8x128xf32>
    %c0_22 = arith.constant 0 : index
    %c0_23 = arith.constant 0 : index
    %103 = vector.load %arg7[%c0_22, %c0_23] : memref<8x128xf32, #tpu.memory_space<vmem>>, vector<8x128xf32>
    tpu.vector_store %arg7[%c0_22, %c0_23], %102 {strides = array<i32>} : memref<8x128xf32, #tpu.memory_space<vmem>>, vector<8x128xf32>,
    %c0_i32_24 = arith.constant 0 : i32
    %104 = arith.cmpi eq, %arg0, %c0_i32_24 : i32
    %105 = arith.extui %104 : i1 to i32
    %c0_i32_25 = arith.constant 0 : i32
    %106 = arith.cmpi ne, %105, %c0_i32_25 : i32
    scf.if %106 {
      %cst_26 = arith.constant 0.000000e+00 : f32
      %107 = vector.broadcast %cst_26 : f32 to vector<1x1xf32>
      %c0_27 = arith.constant 0 : index
      %c0_28 = arith.constant 0 : index
      %108 = vector.load %arg7[%c0_27, %c0_28] : memref<8x128xf32, #tpu.memory_space<vmem>>, vector<8x128xf32>
      %109 = vector.shape_cast %108 : vector<8x128xf32> to vector<1x8x128xf32>
      %cst_29 = arith.constant dense<0.000000e+00> : vector<1xf32>
      %110 = vector.multi_reduction <add>, %109, %cst_29 [1, 2] : vector<1x8x128xf32> to vector<1xf32>
      %111 = vector.shape_cast %110 : vector<1xf32> to vector<1x1x1xf32>
      %112 = vector.extract %111[0, 0, 0] : f32 from vector<1x1x1xf32>
      %113 = vector.broadcast %112 : f32 to vector<1x1xf32>
      %114 = arith.addf %107, %113 : vector<1x1xf32>
      %c0_30 = arith.constant 0 : index
      %c0_31 = arith.constant 0 : index
      %115 = vector.load %arg6[%c0_30, %c0_31] : memref<1x1xf32, #tpu.memory_space<vmem>>, vector<1x1xf32>
      tpu.vector_store %arg6[%c0_30, %c0_31], %114 {strides = array<i32>} : memref<1x1xf32, #tpu.memory_space<vmem>>, vector<1x1xf32>,
    } else {
    }
    return
  }
  func.func @transform_0(%arg0: i32) -> (i32, i32) {
    %c0_i32 = arith.constant 0 : i32
    %c0_i32_0 = arith.constant 0 : i32
    return %arg0, %c0_i32 : i32, i32
  }
  func.func @transform_1(%arg0: i32) -> (i32, i32) {
    %c0_i32 = arith.constant 0 : i32
    %c0_i32_0 = arith.constant 0 : i32
    return %arg0, %c0_i32 : i32, i32
  }
  func.func @transform_2(%arg0: i32) -> i32 {
    %c0_i32 = arith.constant 0 : i32
    %c0_i32_0 = arith.constant 0 : i32
    return %c0_i32 : i32
  }
  func.func @transform_3(%arg0: i32) -> i32 {
    %c0_i32 = arith.constant 0 : i32
    %c0_i32_0 = arith.constant 0 : i32
    return %c0_i32 : i32
  }
  func.func @transform_4(%arg0: i32) -> i32 {
    %c0_i32 = arith.constant 0 : i32
    %c0_i32_0 = arith.constant 0 : i32
    return %c0_i32 : i32
  }
  func.func @transform_5(%arg0: i32) -> (i32, i32) {
    %c0_i32 = arith.constant 0 : i32
    %c0_i32_0 = arith.constant 0 : i32
    %c0_i32_1 = arith.constant 0 : i32
    return %c0_i32, %c0_i32_0 : i32, i32
  }
}

</mosaic_0001>

<llo_original>
// kernel: tpu_custom_call.1
$region0: #{tpu_custom_call.1}
  #allocation0 [shape = 'u32[]', space=smem, size = 0x4, offset = 0x4, fixed_abs, tag = 'smem constant byte address 0x4 - core index']
  #allocation1 [shape = 'u32[144,128]{1,0:T(1,128)}', space=vmem, size = 0x12000, scoped, tag = 'internal scratch']
  #allocation2 [shape = 'f32[8,128]{1,0:T(8,128)}', space=vmem, size = 0x1000, scoped, tag = 'scratch operand']
  %s0 = inlined_call_operand.hbm [shape: f32[8,128], index: 0, kind: input, shape index: {}]
  %s1 = inlined_call_operand.hbm [shape: s32[8,128], index: 1, kind: input, shape index: {}]
  %s2 = inlined_call_operand.vmem [shape: f32[12], index: 2, kind: input, shape index: {}]
  %s3 = inlined_call_operand.vmem [shape: f32[4], index: 3, kind: input, shape index: {}]
  %s4 = inlined_call_operand.vmem [shape: f32[3], index: 4, kind: input, shape index: {}]
  %s5 = inlined_call_operand.hbm [shape: f32[1,1], index: 5, kind: output, shape index: {}]
  %s6 = sld [smem:[#allocation0]]
  $region58: #{tpu_custom_call.1} parent=0
    _
  %s8 = ssub.s32 1, %s6
  %s9 = scalar_select 0, %s8, %s6
  $region1: #{tpu_custom_call.1} parent=0
    #allocation3 [shape = 'u8[4096]{0}', space=vmem, size = 0x1000, scoped, tag = 'input window, operand 0, single buffered']
    #allocation4 [shape = 's32[1]{0}', space=sflag, size = 0x4, scoped, tag = 'scoped memory for tpu_custom_call.1']
    #allocation5 [shape = 's32[1]{0}', space=sflag, size = 0x4, scoped, tag = 'scoped memory for tpu_custom_call.1']
    #allocation6 [shape = 's32[1]{0}', space=sflag, size = 0x4, scoped, tag = 'scoped memory for tpu_custom_call.1']
    #allocation7 [shape = 'u8[4096]{0}', space=vmem, size = 0x1000, scoped, tag = 'input window, operand 1, single buffered']
    #allocation8 [shape = 's32[1]{0}', space=sflag, size = 0x4, scoped, tag = 'scoped memory for tpu_custom_call.1']
    #allocation9 [shape = 'u8[512]{0}', space=smem, size = 0x200, scoped, tag = 'input window, operand 2, single buffered']
    #allocation10 [shape = 'u8[512]{0}', space=smem, size = 0x200, scoped, tag = 'input window, operand 3, single buffered']
    #allocation11 [shape = 's32[1]{0}', space=sflag, size = 0x4, scoped, tag = 'scoped memory for tpu_custom_call.1']
    #allocation12 [shape = 'u8[512]{0}', space=smem, size = 0x200, scoped, tag = 'input window, operand 4, single buffered']
    #allocation13 [shape = 'u8[512]{0}', space=vmem, size = 0x400, scoped, tag = 'output window, operand 0, single buffered']
    %10 = vsyncpa [#allocation4], 0
    %11 = vsyncpa [#allocation8], 0
    %12 = vsyncpa [#allocation6], 0
    %13 = vsyncpa [#allocation11], 0
    %14 = vsyncpa [#allocation5], 0
    // Predicated region
    $region2: #{tpu_custom_call.1} parent=1 // pred_check
      _
    $region3: #{tpu_custom_call.1} parent=1 // pred_check_branch
      %16 = sbr.rel (0) target = $region5
    $region4: #{tpu_custom_call.1} parent=1 // pred_region
      %s18 = ssub.s32 128, 128
      %19 = vsyncadd [#allocation4], %s18
      %s21 = sshll.u32 [#allocation3], 4
      %s22 = int_to_ptr.vmem [resolvable:$true] %s21
      %24 = dma.hbm_to_vmem [thread:$0]  %s0, 128, %s22, [#allocation4]
    $region5: #{tpu_custom_call.1} parent=1 // pred_fallthru
      _
    // Predicated region
    $region6: #{tpu_custom_call.1} parent=1 // pred_check
      _
    $region7: #{tpu_custom_call.1} parent=1 // pred_check_branch
      %26 = sbr.rel (0) target = $region9
    $region8: #{tpu_custom_call.1} parent=1 // pred_region
      %s28 = ssub.s32 128, 128
      %29 = vsyncadd [#allocation8], %s28
      %s31 = sshll.u32 [#allocation7], 4
      %s32 = int_to_ptr.vmem [resolvable:$true] %s31
      %34 = dma.hbm_to_vmem [thread:$0]  %s1, 128, %s32, [#allocation8]
    $region9: #{tpu_custom_call.1} parent=1 // pred_fallthru
      _
    // Predicated region
    $region10: #{tpu_custom_call.1} parent=1 // pred_check
      _
    $region11: #{tpu_custom_call.1} parent=1 // pred_check_branch
      %36 = sbr.rel (0) target = $region13
    $region12: #{tpu_custom_call.1} parent=1 // pred_region
      %s38 = ssub.s32 16, 16
      %39 = vsyncadd [#allocation6], %s38
      %s41 = sshll.u32 %s2, 4
      %s42 = int_to_ptr.vmem [resolvable:$true] %s41
      %44 = dma.vmem_to_smem %s42, 16, [#allocation9], [#allocation6]
    $region13: #{tpu_custom_call.1} parent=1 // pred_fallthru
      _
    // Predicated region
    $region14: #{tpu_custom_call.1} parent=1 // pred_check
      _
    $region15: #{tpu_custom_call.1} parent=1 // pred_check_branch
      %46 = sbr.rel (0) target = $region17
    $region16: #{tpu_custom_call.1} parent=1 // pred_region
      %s48 = ssub.s32 16, 16
      %49 = vsyncadd [#allocation11], %s48
      %s51 = sshll.u32 %s3, 4
      %s52 = int_to_ptr.vmem [resolvable:$true] %s51
      %54 = dma.vmem_to_smem %s52, 16, [#allocation10], [#allocation11]
    $region17: #{tpu_custom_call.1} parent=1 // pred_fallthru
      _
    // Predicated region
    $region18: #{tpu_custom_call.1} parent=1 // pred_check
      _
    $region19: #{tpu_custom_call.1} parent=1 // pred_check_branch
      %56 = sbr.rel (0) target = $region21
    $region20: #{tpu_custom_call.1} parent=1 // pred_region
      %s58 = ssub.s32 16, 16
      %59 = vsyncadd [#allocation11], %s58
      %s61 = sshll.u32 %s4, 4
      %s62 = int_to_ptr.vmem [resolvable:$true] %s61
      %64 = dma.vmem_to_smem %s62, 16, [#allocation12], [#allocation11]
    $region21: #{tpu_custom_call.1} parent=1 // pred_fallthru
      _
    // Predicated region
    $region22: #{tpu_custom_call.1} parent=1 // pred_check
      _
    $region23: #{tpu_custom_call.1} parent=1 // pred_check_branch
      %66 = sbr.rel (0) target = $region25
    $region24: #{tpu_custom_call.1} parent=1 // pred_region
      %67 = dma.done [#allocation4], 128
    $region25: #{tpu_custom_call.1} parent=1 // pred_fallthru
      _
    // Predicated region
    $region26: #{tpu_custom_call.1} parent=1 // pred_check
      _
    $region27: #{tpu_custom_call.1} parent=1 // pred_check_branch
      %69 = sbr.rel (0) target = $region29
    $region28: #{tpu_custom_call.1} parent=1 // pred_region
      %70 = dma.done [#allocation8], 128
    $region29: #{tpu_custom_call.1} parent=1 // pred_fallthru
      _
    // Predicated region
    $region30: #{tpu_custom_call.1} parent=1 // pred_check
      _
    $region31: #{tpu_custom_call.1} parent=1 // pred_check_branch
      %72 = sbr.rel (0) target = $region33
    $region32: #{tpu_custom_call.1} parent=1 // pred_region
      %73 = dma.done [#allocation6], 16
    $region33: #{tpu_custom_call.1} parent=1 // pred_fallthru
      _
    // Predicated region
    $region34: #{tpu_custom_call.1} parent=1 // pred_check
      _
    $region35: #{tpu_custom_call.1} parent=1 // pred_check_branch
      %75 = sbr.rel (0) target = $region37
    $region36: #{tpu_custom_call.1} parent=1 // pred_region
      %76 = dma.done [#allocation11], 16
    $region37: #{tpu_custom_call.1} parent=1 // pred_fallthru
      _
    // Predicated region
    $region38: #{tpu_custom_call.1} parent=1 // pred_check
      _
    $region39: #{tpu_custom_call.1} parent=1 // pred_check_branch
      %78 = sbr.rel (0) target = $region41
    $region40: #{tpu_custom_call.1} parent=1 // pred_region
      %79 = dma.done [#allocation11], 16
    $region41: #{tpu_custom_call.1} parent=1 // pred_fallthru
      _
    %80 = sfence
    %p81 = scmp.eq.s32.totalorder 0, 0
    // Predicated region
    $region42: #{tpu_custom_call.1} parent=1 // pred_check
      %p82 = pneg %p81
    $region43: #{tpu_custom_call.1} parent=1 // pred_check_branch
      %84 = sbr.rel (%p82) target = $region45
    $region44: #{tpu_custom_call.1} parent=1 // pred_region
      %85 = vst [vmem:[#allocation2] sm:$0xff] 0.0
    $region45: #{tpu_custom_call.1} parent=1 // pred_fallthru
      _
    %v86 = vld [vmem:[#allocation3] sm:$0xff]
    %v87 = vld [vmem:[#allocation7] sm:$0xff]
    %v88 = vmul.f32 %v86, 1.442695
    %v89 = vpow.pop %v88
    %s90 = sld [smem:[#allocation12]]
    %v91 = vstv %s90
    %v92 = vmul.f32 %v89, %v91
    %v93 = vadd.f32 %v92, 1.0
    %v94 = vrcp.pop %v93
    %s95 = sld [smem:[#allocation12 + $0x1]]
    %v96 = vstv %s95
    %v97 = vmul.f32 %v89, %v96
    %v98 = vadd.f32 %v97, 1.0
    %v99 = vrcp.pop %v98
    %s100 = sld [smem:[#allocation12 + $0x2]]
    %v101 = vstv %s100
    %v102 = vmul.f32 %v89, %v101
    %v103 = vadd.f32 %v102, 1.0
    %v104 = vrcp.pop %v103
    %s105 = sld [smem:[#allocation10]]
    %s106 = sld [smem:[#allocation9]]
    %v107 = vstv %s106
    %v108 = vmul.f32 %v107, %v94
    %v109 = vstv %s105
    %v110 = vadd.f32 %v109, %v108
    %s111 = sld [smem:[#allocation9 + $0x4]]
    %v112 = vstv %s111
    %v113 = vmul.f32 %v112, %v99
    %v114 = vadd.f32 %v110, %v113
    %s115 = sld [smem:[#allocation9 + $0x8]]
    %v116 = vstv %s115
    %v117 = vmul.f32 %v116, %v104
    %v118 = vadd.f32 %v114, %v117
    %vm119 = vcmp.eq.s32.totalorder %v87, 0
    %v120 = vsel %vm119, %v118, 0.0
    %v121 = vadd.f32 %v120, 0.0
    %s122 = sld [smem:[#allocation10 + $0x1]]
    %s123 = sld [smem:[#allocation9 + $0x1]]
    %v124 = vstv %s123
    %v125 = vmul.f32 %v124, %v94
    %v126 = vstv %s122
    %v127 = vadd.f32 %v126, %v125
    %s128 = sld [smem:[#allocation9 + $0x5]]
    %v129 = vstv %s128
    %v130 = vmul.f32 %v129, %v99
    %v131 = vadd.f32 %v127, %v130
    %s132 = sld [smem:[#allocation9 + $0x9]]
    %v133 = vstv %s132
    %v134 = vmul.f32 %v133, %v104
    %v135 = vadd.f32 %v131, %v134
    %vm136 = vcmp.eq.s32.totalorder %v87, 1
    %v137 = vsel %vm136, %v135, 0.0
    %v138 = vadd.f32 %v121, %v137
    %s139 = sld [smem:[#allocation10 + $0x2]]
    %s140 = sld [smem:[#allocation9 + $0x2]]
    %v141 = vstv %s140
    %v142 = vmul.f32 %v141, %v94
    %v143 = vstv %s139
    %v144 = vadd.f32 %v143, %v142
    %s145 = sld [smem:[#allocation9 + $0x6]]
    %v146 = vstv %s145
    %v147 = vmul.f32 %v146, %v99
    %v148 = vadd.f32 %v144, %v147
    %s149 = sld [smem:[#allocation9 + $0xa]]
    %v150 = vstv %s149
    %v151 = vmul.f32 %v150, %v104
    %v152 = vadd.f32 %v148, %v151
    %vm153 = vcmp.eq.s32.totalorder %v87, 2
    %v154 = vsel %vm153, %v152, 0.0
    %v155 = vadd.f32 %v138, %v154
    %s156 = sld [smem:[#allocation10 + $0x3]]
    %s157 = sld [smem:[#allocation9 + $0x3]]
    %v158 = vstv %s157
    %v159 = vmul.f32 %v158, %v94
    %v160 = vstv %s156
    %v161 = vadd.f32 %v160, %v159
    %s162 = sld [smem:[#allocation9 + $0x7]]
    %v163 = vstv %s162
    %v164 = vmul.f32 %v163, %v99
    %v165 = vadd.f32 %v161, %v164
    %s166 = sld [smem:[#allocation9 + $0xb]]
    %v167 = vstv %s166
    %v168 = vmul.f32 %v167, %v104
    %v169 = vadd.f32 %v165, %v168
    %vm170 = vcmp.eq.s32.totalorder %v87, 3
    %v171 = vsel %vm170, %v169, 0.0
    %v172 = vadd.f32 %v155, %v171
    %v173 = vld [vmem:[#allocation2] sm:$0xff]
    %v174 = vadd.f32 %v173, %v172
    %175 = vst [vmem:[#allocation2] sm:$0xff] %v174
    // Predicated region
    $region46: #{tpu_custom_call.1} parent=1 // pred_check
      %p176 = pneg %p81
    $region47: #{tpu_custom_call.1} parent=1 // pred_check_branch
      %178 = sbr.rel (%p176) target = $region49
    $region48: #{tpu_custom_call.1} parent=1 // pred_region
      %v179 = vld [vmem:[#allocation2] sm:$0xff]
      %180 = vadd.xlane.f32.xlu0 %v179
      %v181 = vpop.xlane.xlu0 %180
      %v182 = vrot.slane %v181, 4
      %v183 = vadd.f32 %v181, %v182
      %v184 = vrot.slane %v183, 2
      %v185 = vadd.f32 %v183, %v184
      %v186 = vrot.slane %v185, 1
      %v187 = vadd.f32 %v185, %v186
      %s188 = vtos %v187
      %v189 = vstv %s188
      %v190 = vadd.f32 %v189, 0.0
      %vm191 = vcmask 0
      %192 = vst.msk [vmem:[#allocation13] sm:$0x1] %vm191, %v190
    $region49: #{tpu_custom_call.1} parent=1 // pred_fallthru
      _
    // Predicated region
    $region50: #{tpu_custom_call.1} parent=1 // pred_check
      _
    $region51: #{tpu_custom_call.1} parent=1 // pred_check_branch
      %194 = sbr.rel (0) target = $region53
    $region52: #{tpu_custom_call.1} parent=1 // pred_region
      %s196 = ssub.s32 16, 16
      %197 = vsyncadd [#allocation5], %s196
      %s199 = sshll.u32 [#allocation13], 4
      %s200 = int_to_ptr.vmem [resolvable:$true] %s199
      %202 = dma.vmem_to_hbm [thread:$0]  %s200, 16, %s5, [#allocation5]
    $region53: #{tpu_custom_call.1} parent=1 // pred_fallthru
      _
    // Predicated region
    $region54: #{tpu_custom_call.1} parent=1 // pred_check
      _
    $region55: #{tpu_custom_call.1} parent=1 // pred_check_branch
      %204 = sbr.rel (0) target = $region57
    $region56: #{tpu_custom_call.1} parent=1 // pred_region
      %205 = dma.done [#allocation5], 16
    $region57: #{tpu_custom_call.1} parent=1 // pred_fallthru
      _
    %206 = vsyncpa [#allocation4], 1
    %207 = vsyncpa [#allocation8], 1
    %208 = vsyncpa [#allocation5], 1
    %209 = vsyncpa [#allocation6], 1
    %210 = vsyncpa [#allocation11], 1

</llo_original>
